<compile_context>
chip_gen: v5e
topology: v5e:2x2
jax: 0.10.0
libtpu: 0.0.40
codegen_flags: <defaults>
</compile_context>

<pallas_src>
import functools

import jax
import jax.numpy as jnp
from jax.experimental import pallas as pl
from jax.experimental.pallas import tpu as pltpu

LN_EPS = 1e-12          # BertConfig default layer_norm_eps
_LANES = 128            # lane width everything is padded/packed to
_ROW_PAD = 8            # pad activation rows to a sublane multiple


def _round_up(x, m):
    return -(-x // m) * m


# -----------------------------------------------------------------------------
# Fused forward kernel: everything resident in VMEM, single gridless call.
# Inputs: x (rows, in_rows) f32, packed global/per-layer weight slabs.
# -----------------------------------------------------------------------------
def _fused_forward_kernel(x_ref, wg_mat_ref, wg_vec_ref, wl_mat_ref, wl_vec_ref,
                          o_ref, *, n_layer, hidden_dim, in_rows):
    inv_h = 1.0 / float(hidden_dim)

    def ln(x, g, b):
        # One-pass LN: both lane reductions are independent -> overlap on XLU.
        # Padded lanes contribute 0 to both sums; divide by the real width.
        mu = jnp.sum(x, axis=-1, keepdims=True) * inv_h
        ex2 = jnp.sum(x * x, axis=-1, keepdims=True) * inv_h
        var = jnp.maximum(ex2 - mu * mu, 0.0)
        # g/b are zero-padded beyond hidden_dim, so padded lanes stay 0.
        return (x - mu) * jax.lax.rsqrt(var + LN_EPS) * g + b

    def mxu(a, w):
        # bf16 operands, f32 accumulation: one MXU pass instead of fp32 3x.
        return jnp.dot(a.astype(jnp.bfloat16), w,
                       preferred_element_type=jnp.float32)

    gvec = wg_vec_ref[...]                                   # (8, 128) f32

    # input_layer + folded (in_b + pos_emb[0] + type_emb[0]) bias, then LN.
    h = mxu(x_ref[...], wg_mat_ref[0:in_rows, :]) + gvec[0:1, :]
    h = ln(h, gvec[1:2, :], gvec[2:3, :])

    # Encoder layers. seq_len == 1 => attention context == V exactly, and the
    # V / attention-output projections are pre-fused on the host (W_vo, b_vo).
    for l in range(n_layer):                                 # static unroll
        lv = wl_vec_ref[l]                                   # (8, 128) f32
        ao = mxu(h, wl_mat_ref[l, 0:_LANES, :]) + lv[0:1, :]
        h1 = ln(ao + h, lv[1:2, :], lv[2:3, :])              # attn residual+LN
        inter = jax.nn.gelu(
            mxu(h1, wl_mat_ref[l, _LANES:2 * _LANES, :]) + lv[3:4, :],
            approximate=True)                                # tanh GELU (EUP)
        ffo = mxu(inter, wl_mat_ref[l, 2 * _LANES:3 * _LANES, :]) + lv[4:5, :]
        h = ln(ffo + h1, lv[5:6, :], lv[6:7, :])             # ffn residual+LN

    # BertPooler + fused (fc1∘fc2) head: VPU multiply + lane reduce, then the
    # scalar head bias is applied as a pre-broadcast (1,128) row so the result
    # is already a lane-dense slab (unmasked vst); every lane holds the answer.
    pooled = jnp.tanh(mxu(h, wg_mat_ref[in_rows:in_rows + _LANES, :])
                      + gvec[3:4, :])
    s = jnp.sum(pooled * gvec[4:5, :], axis=-1, keepdims=True)   # (rows, 1)
    o_ref[...] = jax.nn.sigmoid(jnp.broadcast_to(s, o_ref.shape) + gvec[5:6, :])


def _fused_forward(x_pad, packed, *, n_layer, hidden_dim, in_rows):
    vmem = pl.BlockSpec(memory_space=pltpu.MemorySpace.VMEM)
    return pl.pallas_call(
        functools.partial(_fused_forward_kernel, n_layer=n_layer,
                          hidden_dim=hidden_dim, in_rows=in_rows),
        out_shape=jax.ShapeDtypeStruct((x_pad.shape[0], _LANES), jnp.float32),
        in_specs=[vmem] * 5,
        out_specs=vmem,
    )(x_pad, packed["wg_mat"], packed["wg_vec"],
      packed["wl_mat"], packed["wl_vec"])


# -----------------------------------------------------------------------------
# Parameter initialization (deterministic, synthetic; layer weights stacked).
# Biases / LN params are randomized so the reference check exercises the
# host-side fusions and zero-padding for real.
# -----------------------------------------------------------------------------
def init_params(key, input_dim, hidden_dim, n_layer, intermediate_dim,
                max_pos=16):
    keys = iter(jax.random.split(key, 64))

    def dense(k, fan_in, fan_out):
        kw, kb = jax.random.split(k)
        return (0.02 * jax.random.normal(kw, (fan_in, fan_out), jnp.float32),
                0.02 * jax.random.normal(kb, (1, fan_out), jnp.float32))

    def ln_pair(k, n=None):
        kg, kb = jax.random.split(k)
        shape = (1, hidden_dim) if n is None else (n, 1, hidden_dim)
        return (1.0 + 0.1 * jax.random.normal(kg, shape, jnp.float32),
                0.05 * jax.random.normal(kb, shape, jnp.float32))

    def stack(make):
        ws, bs = zip(*[make(next(keys)) for _ in range(n_layer)])
        return jnp.stack(ws), jnp.stack(bs)

    p = {}
    p["in_w"], p["in_b"] = dense(next(keys), input_dim, hidden_dim)
    # token_embedding exists in the module but is unused by forward()
    p["tok_emb"] = 0.02 * jax.random.normal(next(keys), (2, hidden_dim), jnp.float32)
    p["pos_emb"] = 0.02 * jax.random.normal(next(keys), (max_pos, hidden_dim), jnp.float32)
    p["type_emb"] = 0.02 * jax.random.normal(next(keys), (2, hidden_dim), jnp.float32)
    p["emb_ln_g"], p["emb_ln_b"] = ln_pair(next(keys))

    # q/k exist in BertSelfAttention but cannot affect the output when
    # seq_len == 1 (softmax over one key == 1); kept only for structure fidelity.
    p["q_w"], p["q_b"] = stack(lambda k: dense(k, hidden_dim, hidden_dim))
    p["k_w"], p["k_b"] = stack(lambda k: dense(k, hidden_dim, hidden_dim))
    p["v_w"], p["v_b"] = stack(lambda k: dense(k, hidden_dim, hidden_dim))
    p["ao_w"], p["ao_b"] = stack(lambda k: dense(k, hidden_dim, hidden_dim))
    p["aln_g"], p["aln_b"] = ln_pair(next(keys), n_layer)
    p["i_w"], p["i_b"] = stack(lambda k: dense(k, hidden_dim, intermediate_dim))
    p["o_w"], p["o_b"] = stack(lambda k: dense(k, intermediate_dim, hidden_dim))
    p["oln_g"], p["oln_b"] = ln_pair(next(keys), n_layer)

    p["pool_w"], p["pool_b"] = dense(next(keys), hidden_dim, hidden_dim)
    p["fc1_w"], p["fc1_b"] = dense(next(keys), hidden_dim, hidden_dim // 2)
    p["fc2_w"], p["fc2_b"] = dense(next(keys), hidden_dim // 2, 1)
    return p


# -----------------------------------------------------------------------------
# One-time host-side packing: exact algebraic fusions + lane-pad to 128 +
# pack into 4 buffers (2 bf16 matrix slabs, 2 f32 vector slabs) -> 5 DMAs.
# -----------------------------------------------------------------------------
def pack_params(p):
    n_layer, _, hidden_dim = p["aln_g"].shape
    inter_dim = p["i_b"].shape[-1]
    input_dim = p["in_w"].shape[0]
    # TODO(synk): tile hidden/intermediate > 128 across lane blocks if ever needed.
    assert hidden_dim <= _LANES and inter_dim <= _LANES
    in_rows = _round_up(input_dim, 16)        # bf16 sublane-tile alignment

    def padm(a, rows):                        # matrix -> (rows, 128), zero-pad
        return jnp.pad(a, ((0, rows - a.shape[0]), (0, _LANES - a.shape[1])))

    def padv(a):                              # (1, w) -> (1, 128), zero-pad
        return jnp.pad(a, ((0, 0), (0, _LANES - a.shape[-1])))

    # ---- exact algebraic fusions (f32, host side) ----
    w_vo = jnp.einsum("lij,ljk->lik", p["v_w"], p["ao_w"])
    b_vo = jnp.einsum("lij,ljk->lik", p["v_b"], p["ao_w"]) + p["ao_b"]
    emb_bias = p["in_b"] + p["pos_emb"][0:1] + p["type_emb"][0:1]
    head_w = p["fc1_w"] @ p["fc2_w"]                       # (H, 1)
    head_b = p["fc1_b"] @ p["fc2_w"] + p["fc2_b"]          # (1, 1)

    # ---- global buffers ----
    wg_mat = jnp.concatenate(
        [padm(p["in_w"], in_rows), padm(p["pool_w"], _LANES)],
        axis=0).astype(jnp.bfloat16)                       # (in_rows+128, 128)
    wg_vec = jnp.concatenate(
        [padv(emb_bias), padv(p["emb_ln_g"]), padv(p["emb_ln_b"]),
         padv(p["pool_b"]), padv(head_w.T),
         jnp.full((1, _LANES), head_b[0, 0], jnp.float32),
         jnp.zeros((2, _LANES), jnp.float32)], axis=0)     # (8, 128) f32

    # ---- per-layer buffers ----
    def pack_layer(l):
        mat = jnp.concatenate(
            [padm(w_vo[l], _LANES), padm(p["i_w"][l], _LANES),
             padm(p["o_w"][l], _LANES)], axis=0)           # (384, 128)
        vec = jnp.concatenate(
            [padv(b_vo[l]), padv(p["aln_g"][l]), padv(p["aln_b"][l]),
             padv(p["i_b"][l]), padv(p["o_b"][l]),
             padv(p["oln_g"][l]), padv(p["oln_b"][l]),
             jnp.zeros((1, _LANES), jnp.float32)], axis=0)  # (8, 128)
        return mat, vec

    mats, vecs = zip(*[pack_layer(l) for l in range(n_layer)])
    return {"wg_mat": wg_mat,
            "wg_vec": wg_vec,
            "wl_mat": jnp.stack(mats).astype(jnp.bfloat16),  # (L, 384, 128)
            "wl_vec": jnp.stack(vecs)}                       # (L, 8, 128) f32


# -----------------------------------------------------------------------------
# Top-level forward (jitted; remaining glue is pure layout plumbing).
# If the caller has many dialogues, stack them so `rows` grows toward a few
# hundred before padding — the fixed launch/DMA cost amortizes nearly linearly.
# -----------------------------------------------------------------------------
@functools.partial(jax.jit, static_argnames=("hidden_dim",))
def model_scp_forward(packed, contexts, utt1, utt2, umask, *, hidden_dim):
    # Values derived from `contexts`/`umask` never reach the output (n_contexts
    # is unused; a non-decoder BertModel ignores encoder_attention_mask).
    del contexts, umask

    B = utt1.shape[1]
    rows = 2 * B
    # cat(input_layer(utt1), input_layer(utt2), dim=1).permute(1,0,2) with S=1
    # reduces to projecting the stacked rows [utt1 batch ; utt2 batch].
    x = jnp.concatenate([utt1[0], utt2[0]], axis=0)            # (2B, input_dim)
    rows_pad = _round_up(rows, _ROW_PAD)
    in_rows = packed["wg_mat"].shape[0] - _LANES               # static
    x_pad = jnp.pad(x, ((0, rows_pad - rows), (0, in_rows - x.shape[1])))

    n_layer = packed["wl_mat"].shape[0]
    out = _fused_forward(x_pad, packed, n_layer=n_layer,
                         hidden_dim=hidden_dim, in_rows=in_rows)
    return out[:rows, 0]                                       # squeeze -> (2B,)


# -----------------------------------------------------------------------------
# Pure-JAX reference (exact f32, erf GELU, unfused) for a tolerance check.
# -----------------------------------------------------------------------------
def _reference_forward(p, utt1, utt2):
    def ln(x, g, b):
        mu = jnp.mean(x, axis=-1, keepdims=True)
        var = jnp.mean(jnp.square(x - mu), axis=-1, keepdims=True)
        return (x - mu) * jax.lax.rsqrt(var + LN_EPS) * g + b

    x = jnp.concatenate([utt1[0], utt2[0]], axis=0)
    h = x @ p["in_w"] + p["in_b"] + p["pos_emb"][0:1] + p["type_emb"][0:1]
    h = ln(h, p["emb_ln_g"], p["emb_ln_b"])
    for l in range(p["v_w"].shape[0]):
        v = h @ p["v_w"][l] + p["v_b"][l]
        ao = v @ p["ao_w"][l] + p["ao_b"][l]          # seq_len==1: context == V
        h1 = ln(ao + h, p["aln_g"][l], p["aln_b"][l])
        inter = jax.nn.gelu(h1 @ p["i_w"][l] + p["i_b"][l], approximate=False)
        ffo = inter @ p["o_w"][l] + p["o_b"][l]
        h = ln(ffo + h1, p["oln_g"][l], p["oln_b"][l])
    pooled = jnp.tanh(h @ p["pool_w"] + p["pool_b"])
    t = pooled @ p["fc1_w"] + p["fc1_b"]
    return jax.nn.sigmoid(t @ p["fc2_w"] + p["fc2_b"])[:, 0]


# -----------------------------------------------------------------------------
if __name__ == "__main__":
    input_dim, hidden_dim, n_layer, n_heads, intermediate_dim = 48, 32, 2, 4, 64
    B, num_utt = 2, 3
    # n_heads is part of the BERT config but never needed: with seq_len=1 the
    # per-head softmax is identically 1 and the attention output equals V.

    key = jax.random.PRNGKey(0)
    kp, k1, k2, k3 = jax.random.split(key, 4)
    params = init_params(kp, input_dim, hidden_dim, n_layer, intermediate_dim)
    packed = pack_params(params)          # one-time host-side fuse + pack

    contexts = jax.random.normal(k1, (num_utt, B, 1, input_dim), jnp.float32)
    utt1 = jax.random.normal(k2, (1, B, input_dim), jnp.float32)
    utt2 = jax.random.normal(k3, (1, B, input_dim), jnp.float32)
    umask = jnp.ones((num_utt, B), jnp.float32)

    out = model_scp_forward(packed, contexts, utt1, utt2, umask,
                            hidden_dim=hidden_dim)
    out = jax.block_until_ready(out)
    ref = _reference_forward(params, utt1, utt2)

    assert out.shape == (2 * B,)
    assert bool(jnp.all(jnp.isfinite(out)))
    assert bool(jnp.all((out > 0.0) & (out < 1.0)))
    max_err = float(jnp.max(jnp.abs(out - ref)))
    assert max_err < 2e-2, f"mismatch vs reference: {max_err}"
    print("KERNEL_OK")
</pallas_src>

<mosaic_0001>
module attributes {stable_mosaic.version = 11 : i64} {
  func.func @_fused_forward_kernel(%arg0: memref<8x48xf32, #tpu.memory_space<vmem>>, %arg1: memref<176x128xbf16, #tpu.memory_space<vmem>>, %arg2: memref<8x128xf32, #tpu.memory_space<vmem>>, %arg3: memref<2x384x128xbf16, #tpu.memory_space<vmem>>, %arg4: memref<2x8x128xf32, #tpu.memory_space<vmem>>, %arg5: memref<8x128xf32, #tpu.memory_space<vmem>>) attributes {dimension_semantics = [], scalar_prefetch = 0 : i64, scratch_operands = 0 : i64, tpu.core_type = #tpu.core_type<tc>} {
    %c0 = arith.constant 0 : index
    %c0_0 = arith.constant 0 : index
    %0 = vector.load %arg2[%c0, %c0_0] : memref<8x128xf32, #tpu.memory_space<vmem>>, vector<8x128xf32>
    %c0_1 = arith.constant 0 : index
    %c0_2 = arith.constant 0 : index
    %1 = vector.load %arg0[%c0_1, %c0_2] : memref<8x48xf32, #tpu.memory_space<vmem>>, vector<8x48xf32>
    %c0_3 = arith.constant 0 : index
    %c0_4 = arith.constant 0 : index
    %2 = vector.load %arg1[%c0_3, %c0_4] : memref<176x128xbf16, #tpu.memory_space<vmem>>, vector<48x128xbf16>
    %3 = arith.truncf %1 : vector<8x48xf32> to vector<8x48xbf16>
    %cst = arith.constant dense<0.000000e+00> : vector<8x128xf32>
    %4 = tpu.matmul %3, %2, %cst {dimension_numbers = #tpu.dot_dimension_numbers<[1], [0], [0], [1], [0, 0, 1, 1], [], []>} : vector<8x48xbf16>, vector<48x128xbf16>, vector<8x128xf32> -> vector<8x128xf32>
    %5 = vector.extract_strided_slice %0 {offsets = [0, 0], sizes = [1, 128], strides = [1, 1]} : vector<8x128xf32> to vector<1x128xf32>
    %6 = vector.broadcast %5 : vector<1x128xf32> to vector<8x128xf32>
    %7 = arith.addf %4, %6 : vector<8x128xf32>
    %8 = vector.extract_strided_slice %0 {offsets = [1, 0], sizes = [1, 128], strides = [1, 1]} : vector<8x128xf32> to vector<1x128xf32>
    %9 = vector.extract_strided_slice %0 {offsets = [2, 0], sizes = [1, 128], strides = [1, 1]} : vector<8x128xf32> to vector<1x128xf32>
    %cst_5 = arith.constant dense<0.000000e+00> : vector<8xf32>
    %10 = vector.multi_reduction <add>, %7, %cst_5 [1] : vector<8x128xf32> to vector<8xf32>
    %11 = vector.shape_cast %10 : vector<8xf32> to vector<8x1xf32>
    %cst_6 = arith.constant 3.125000e-02 : f32
    %12 = vector.broadcast %cst_6 : f32 to vector<8x1xf32>
    %13 = arith.mulf %11, %12 : vector<8x1xf32>
    %14 = arith.mulf %7, %7 : vector<8x128xf32>
    %cst_7 = arith.constant dense<0.000000e+00> : vector<8xf32>
    %15 = vector.multi_reduction <add>, %14, %cst_7 [1] : vector<8x128xf32> to vector<8xf32>
    %16 = vector.shape_cast %15 : vector<8xf32> to vector<8x1xf32>
    %cst_8 = arith.constant 3.125000e-02 : f32
    %17 = vector.broadcast %cst_8 : f32 to vector<8x1xf32>
    %18 = arith.mulf %16, %17 : vector<8x1xf32>
    %19 = arith.mulf %13, %13 : vector<8x1xf32>
    %20 = arith.subf %18, %19 : vector<8x1xf32>
    %cst_9 = arith.constant 0.000000e+00 : f32
    %21 = vector.broadcast %cst_9 : f32 to vector<8x1xf32>
    %22 = arith.maximumf %20, %21 : vector<8x1xf32>
    %23 = vector.broadcast %13 : vector<8x1xf32> to vector<8x128xf32>
    %24 = arith.subf %7, %23 : vector<8x128xf32>
    %cst_10 = arith.constant 9.99999996E-13 : f32
    %25 = vector.broadcast %cst_10 : f32 to vector<8x1xf32>
    %26 = arith.addf %22, %25 : vector<8x1xf32>
    %27 = math.rsqrt %26 : vector<8x1xf32>
    %28 = vector.broadcast %27 : vector<8x1xf32> to vector<8x128xf32>
    %29 = arith.mulf %24, %28 : vector<8x128xf32>
    %30 = vector.broadcast %8 : vector<1x128xf32> to vector<8x128xf32>
    %31 = arith.mulf %29, %30 : vector<8x128xf32>
    %32 = vector.broadcast %9 : vector<1x128xf32> to vector<8x128xf32>
    %33 = arith.addf %31, %32 : vector<8x128xf32>
    %c0_11 = arith.constant 0 : index
    %c0_12 = arith.constant 0 : index
    %c0_13 = arith.constant 0 : index
    %34 = vector.load %arg4[%c0_11, %c0_12, %c0_13] : memref<2x8x128xf32, #tpu.memory_space<vmem>>, vector<1x8x128xf32>
    %35 = vector.shape_cast %34 : vector<1x8x128xf32> to vector<8x128xf32>
    %c0_14 = arith.constant 0 : index
    %c0_15 = arith.constant 0 : index
    %c0_16 = arith.constant 0 : index
    %36 = vector.load %arg3[%c0_14, %c0_15, %c0_16] : memref<2x384x128xbf16, #tpu.memory_space<vmem>>, vector<1x128x128xbf16>
    %37 = vector.shape_cast %36 : vector<1x128x128xbf16> to vector<128x128xbf16>
    %38 = arith.truncf %33 : vector<8x128xf32> to vector<8x128xbf16>
    %cst_17 = arith.constant dense<0.000000e+00> : vector<8x128xf32>
    %39 = tpu.matmul %38, %37, %cst_17 {dimension_numbers = #tpu.dot_dimension_numbers<[1], [0], [0], [1], [0, 0, 1, 1], [], []>} : vector<8x128xbf16>, vector<128x128xbf16>, vector<8x128xf32> -> vector<8x128xf32>
    %40 = vector.extract_strided_slice %35 {offsets = [0, 0], sizes = [1, 128], strides = [1, 1]} : vector<8x128xf32> to vector<1x128xf32>
    %41 = vector.broadcast %40 : vector<1x128xf32> to vector<8x128xf32>
    %42 = arith.addf %39, %41 : vector<8x128xf32>
    %43 = arith.addf %42, %33 : vector<8x128xf32>
    %44 = vector.extract_strided_slice %35 {offsets = [1, 0], sizes = [1, 128], strides = [1, 1]} : vector<8x128xf32> to vector<1x128xf32>
    %45 = vector.extract_strided_slice %35 {offsets = [2, 0], sizes = [1, 128], strides = [1, 1]} : vector<8x128xf32> to vector<1x128xf32>
    %cst_18 = arith.constant dense<0.000000e+00> : vector<8xf32>
    %46 = vector.multi_reduction <add>, %43, %cst_18 [1] : vector<8x128xf32> to vector<8xf32>
    %47 = vector.shape_cast %46 : vector<8xf32> to vector<8x1xf32>
    %cst_19 = arith.constant 3.125000e-02 : f32
    %48 = vector.broadcast %cst_19 : f32 to vector<8x1xf32>
    %49 = arith.mulf %47, %48 : vector<8x1xf32>
    %50 = arith.mulf %43, %43 : vector<8x128xf32>
    %cst_20 = arith.constant dense<0.000000e+00> : vector<8xf32>
    %51 = vector.multi_reduction <add>, %50, %cst_20 [1] : vector<8x128xf32> to vector<8xf32>
    %52 = vector.shape_cast %51 : vector<8xf32> to vector<8x1xf32>
    %cst_21 = arith.constant 3.125000e-02 : f32
    %53 = vector.broadcast %cst_21 : f32 to vector<8x1xf32>
    %54 = arith.mulf %52, %53 : vector<8x1xf32>
    %55 = arith.mulf %49, %49 : vector<8x1xf32>
    %56 = arith.subf %54, %55 : vector<8x1xf32>
    %cst_22 = arith.constant 0.000000e+00 : f32
    %57 = vector.broadcast %cst_22 : f32 to vector<8x1xf32>
    %58 = arith.maximumf %56, %57 : vector<8x1xf32>
    %59 = vector.broadcast %49 : vector<8x1xf32> to vector<8x128xf32>
    %60 = arith.subf %43, %59 : vector<8x128xf32>
    %cst_23 = arith.constant 9.99999996E-13 : f32
    %61 = vector.broadcast %cst_23 : f32 to vector<8x1xf32>
    %62 = arith.addf %58, %61 : vector<8x1xf32>
    %63 = math.rsqrt %62 : vector<8x1xf32>
    %64 = vector.broadcast %63 : vector<8x1xf32> to vector<8x128xf32>
    %65 = arith.mulf %60, %64 : vector<8x128xf32>
    %66 = vector.broadcast %44 : vector<1x128xf32> to vector<8x128xf32>
    %67 = arith.mulf %65, %66 : vector<8x128xf32>
    %68 = vector.broadcast %45 : vector<1x128xf32> to vector<8x128xf32>
    %69 = arith.addf %67, %68 : vector<8x128xf32>
    %c0_24 = arith.constant 0 : index
    %c128 = arith.constant 128 : index
    %c0_25 = arith.constant 0 : index
    %70 = vector.load %arg3[%c0_24, %c128, %c0_25] : memref<2x384x128xbf16, #tpu.memory_space<vmem>>, vector<1x128x128xbf16>
    %71 = vector.shape_cast %70 : vector<1x128x128xbf16> to vector<128x128xbf16>
    %72 = arith.truncf %69 : vector<8x128xf32> to vector<8x128xbf16>
    %cst_26 = arith.constant dense<0.000000e+00> : vector<8x128xf32>
    %73 = tpu.matmul %72, %71, %cst_26 {dimension_numbers = #tpu.dot_dimension_numbers<[1], [0], [0], [1], [0, 0, 1, 1], [], []>} : vector<8x128xbf16>, vector<128x128xbf16>, vector<8x128xf32> -> vector<8x128xf32>
    %74 = vector.extract_strided_slice %35 {offsets = [3, 0], sizes = [1, 128], strides = [1, 1]} : vector<8x128xf32> to vector<1x128xf32>
    %75 = vector.broadcast %74 : vector<1x128xf32> to vector<8x128xf32>
    %76 = arith.addf %73, %75 : vector<8x128xf32>
    %77 = arith.mulf %76, %76 : vector<8x128xf32>
    %78 = arith.mulf %76, %77 : vector<8x128xf32>
    %cst_27 = arith.constant 4.471500e-02 : f32
    %79 = vector.broadcast %cst_27 : f32 to vector<8x128xf32>
    %80 = arith.mulf %79, %78 : vector<8x128xf32>
    %81 = arith.addf %76, %80 : vector<8x128xf32>
    %cst_28 = arith.constant 0.797884583 : f32
    %82 = vector.broadcast %cst_28 : f32 to vector<8x128xf32>
    %83 = arith.mulf %82, %81 : vector<8x128xf32>
    %84 = math.tanh %83 : vector<8x128xf32>
    %cst_29 = arith.constant 1.000000e+00 : f32
    %85 = vector.broadcast %cst_29 : f32 to vector<8x128xf32>
    %86 = arith.addf %85, %84 : vector<8x128xf32>
    %cst_30 = arith.constant 5.000000e-01 : f32
    %87 = vector.broadcast %cst_30 : f32 to vector<8x128xf32>
    %88 = arith.mulf %87, %86 : vector<8x128xf32>
    %89 = arith.mulf %76, %88 : vector<8x128xf32>
    %c0_31 = arith.constant 0 : index
    %c256 = arith.constant 256 : index
    %c0_32 = arith.constant 0 : index
    %90 = vector.load %arg3[%c0_31, %c256, %c0_32] : memref<2x384x128xbf16, #tpu.memory_space<vmem>>, vector<1x128x128xbf16>
    %91 = vector.shape_cast %90 : vector<1x128x128xbf16> to vector<128x128xbf16>
    %92 = arith.truncf %89 : vector<8x128xf32> to vector<8x128xbf16>
    %cst_33 = arith.constant dense<0.000000e+00> : vector<8x128xf32>
    %93 = tpu.matmul %92, %91, %cst_33 {dimension_numbers = #tpu.dot_dimension_numbers<[1], [0], [0], [1], [0, 0, 1, 1], [], []>} : vector<8x128xbf16>, vector<128x128xbf16>, vector<8x128xf32> -> vector<8x128xf32>
    %94 = vector.extract_strided_slice %35 {offsets = [4, 0], sizes = [1, 128], strides = [1, 1]} : vector<8x128xf32> to vector<1x128xf32>
    %95 = vector.broadcast %94 : vector<1x128xf32> to vector<8x128xf32>
    %96 = arith.addf %93, %95 : vector<8x128xf32>
    %97 = arith.addf %96, %69 : vector<8x128xf32>
    %98 = vector.extract_strided_slice %35 {offsets = [5, 0], sizes = [1, 128], strides = [1, 1]} : vector<8x128xf32> to vector<1x128xf32>
    %99 = vector.extract_strided_slice %35 {offsets = [6, 0], sizes = [1, 128], strides = [1, 1]} : vector<8x128xf32> to vector<1x128xf32>
    %cst_34 = arith.constant dense<0.000000e+00> : vector<8xf32>
    %100 = vector.multi_reduction <add>, %97, %cst_34 [1] : vector<8x128xf32> to vector<8xf32>
    %101 = vector.shape_cast %100 : vector<8xf32> to vector<8x1xf32>
    %cst_35 = arith.constant 3.125000e-02 : f32
    %102 = vector.broadcast %cst_35 : f32 to vector<8x1xf32>
    %103 = arith.mulf %101, %102 : vector<8x1xf32>
    %104 = arith.mulf %97, %97 : vector<8x128xf32>
    %cst_36 = arith.constant dense<0.000000e+00> : vector<8xf32>
    %105 = vector.multi_reduction <add>, %104, %cst_36 [1] : vector<8x128xf32> to vector<8xf32>
    %106 = vector.shape_cast %105 : vector<8xf32> to vector<8x1xf32>
    %cst_37 = arith.constant 3.125000e-02 : f32
    %107 = vector.broadcast %cst_37 : f32 to vector<8x1xf32>
    %108 = arith.mulf %106, %107 : vector<8x1xf32>
    %109 = arith.mulf %103, %103 : vector<8x1xf32>
    %110 = arith.subf %108, %109 : vector<8x1xf32>
    %cst_38 = arith.constant 0.000000e+00 : f32
    %111 = vector.broadcast %cst_38 : f32 to vector<8x1xf32>
    %112 = arith.maximumf %110, %111 : vector<8x1xf32>
    %113 = vector.broadcast %103 : vector<8x1xf32> to vector<8x128xf32>
    %114 = arith.subf %97, %113 : vector<8x128xf32>
    %cst_39 = arith.constant 9.99999996E-13 : f32
    %115 = vector.broadcast %cst_39 : f32 to vector<8x1xf32>
    %116 = arith.addf %112, %115 : vector<8x1xf32>
    %117 = math.rsqrt %116 : vector<8x1xf32>
    %118 = vector.broadcast %117 : vector<8x1xf32> to vector<8x128xf32>
    %119 = arith.mulf %114, %118 : vector<8x128xf32>
    %120 = vector.broadcast %98 : vector<1x128xf32> to vector<8x128xf32>
    %121 = arith.mulf %119, %120 : vector<8x128xf32>
    %122 = vector.broadcast %99 : vector<1x128xf32> to vector<8x128xf32>
    %123 = arith.addf %121, %122 : vector<8x128xf32>
    %c1 = arith.constant 1 : index
    %c0_40 = arith.constant 0 : index
    %c0_41 = arith.constant 0 : index
    %124 = vector.load %arg4[%c1, %c0_40, %c0_41] : memref<2x8x128xf32, #tpu.memory_space<vmem>>, vector<1x8x128xf32>
    %125 = vector.shape_cast %124 : vector<1x8x128xf32> to vector<8x128xf32>
    %c1_42 = arith.constant 1 : index
    %c0_43 = arith.constant 0 : index
    %c0_44 = arith.constant 0 : index
    %126 = vector.load %arg3[%c1_42, %c0_43, %c0_44] : memref<2x384x128xbf16, #tpu.memory_space<vmem>>, vector<1x128x128xbf16>
    %127 = vector.shape_cast %126 : vector<1x128x128xbf16> to vector<128x128xbf16>
    %128 = arith.truncf %123 : vector<8x128xf32> to vector<8x128xbf16>
    %cst_45 = arith.constant dense<0.000000e+00> : vector<8x128xf32>
    %129 = tpu.matmul %128, %127, %cst_45 {dimension_numbers = #tpu.dot_dimension_numbers<[1], [0], [0], [1], [0, 0, 1, 1], [], []>} : vector<8x128xbf16>, vector<128x128xbf16>, vector<8x128xf32> -> vector<8x128xf32>
    %130 = vector.extract_strided_slice %125 {offsets = [0, 0], sizes = [1, 128], strides = [1, 1]} : vector<8x128xf32> to vector<1x128xf32>
    %131 = vector.broadcast %130 : vector<1x128xf32> to vector<8x128xf32>
    %132 = arith.addf %129, %131 : vector<8x128xf32>
    %133 = arith.addf %132, %123 : vector<8x128xf32>
    %134 = vector.extract_strided_slice %125 {offsets = [1, 0], sizes = [1, 128], strides = [1, 1]} : vector<8x128xf32> to vector<1x128xf32>
    %135 = vector.extract_strided_slice %125 {offsets = [2, 0], sizes = [1, 128], strides = [1, 1]} : vector<8x128xf32> to vector<1x128xf32>
    %cst_46 = arith.constant dense<0.000000e+00> : vector<8xf32>
    %136 = vector.multi_reduction <add>, %133, %cst_46 [1] : vector<8x128xf32> to vector<8xf32>
    %137 = vector.shape_cast %136 : vector<8xf32> to vector<8x1xf32>
    %cst_47 = arith.constant 3.125000e-02 : f32
    %138 = vector.broadcast %cst_47 : f32 to vector<8x1xf32>
    %139 = arith.mulf %137, %138 : vector<8x1xf32>
    %140 = arith.mulf %133, %133 : vector<8x128xf32>
    %cst_48 = arith.constant dense<0.000000e+00> : vector<8xf32>
    %141 = vector.multi_reduction <add>, %140, %cst_48 [1] : vector<8x128xf32> to vector<8xf32>
    %142 = vector.shape_cast %141 : vector<8xf32> to vector<8x1xf32>
    %cst_49 = arith.constant 3.125000e-02 : f32
    %143 = vector.broadcast %cst_49 : f32 to vector<8x1xf32>
    %144 = arith.mulf %142, %143 : vector<8x1xf32>
    %145 = arith.mulf %139, %139 : vector<8x1xf32>
    %146 = arith.subf %144, %145 : vector<8x1xf32>
    %cst_50 = arith.constant 0.000000e+00 : f32
    %147 = vector.broadcast %cst_50 : f32 to vector<8x1xf32>
    %148 = arith.maximumf %146, %147 : vector<8x1xf32>
    %149 = vector.broadcast %139 : vector<8x1xf32> to vector<8x128xf32>
    %150 = arith.subf %133, %149 : vector<8x128xf32>
    %cst_51 = arith.constant 9.99999996E-13 : f32
    %151 = vector.broadcast %cst_51 : f32 to vector<8x1xf32>
    %152 = arith.addf %148, %151 : vector<8x1xf32>
    %153 = math.rsqrt %152 : vector<8x1xf32>
    %154 = vector.broadcast %153 : vector<8x1xf32> to vector<8x128xf32>
    %155 = arith.mulf %150, %154 : vector<8x128xf32>
    %156 = vector.broadcast %134 : vector<1x128xf32> to vector<8x128xf32>
    %157 = arith.mulf %155, %156 : vector<8x128xf32>
    %158 = vector.broadcast %135 : vector<1x128xf32> to vector<8x128xf32>
    %159 = arith.addf %157, %158 : vector<8x128xf32>
    %c1_52 = arith.constant 1 : index
    %c128_53 = arith.constant 128 : index
    %c0_54 = arith.constant 0 : index
    %160 = vector.load %arg3[%c1_52, %c128_53, %c0_54] : memref<2x384x128xbf16, #tpu.memory_space<vmem>>, vector<1x128x128xbf16>
    %161 = vector.shape_cast %160 : vector<1x128x128xbf16> to vector<128x128xbf16>
    %162 = arith.truncf %159 : vector<8x128xf32> to vector<8x128xbf16>
    %cst_55 = arith.constant dense<0.000000e+00> : vector<8x128xf32>
    %163 = tpu.matmul %162, %161, %cst_55 {dimension_numbers = #tpu.dot_dimension_numbers<[1], [0], [0], [1], [0, 0, 1, 1], [], []>} : vector<8x128xbf16>, vector<128x128xbf16>, vector<8x128xf32> -> vector<8x128xf32>
    %164 = vector.extract_strided_slice %125 {offsets = [3, 0], sizes = [1, 128], strides = [1, 1]} : vector<8x128xf32> to vector<1x128xf32>
    %165 = vector.broadcast %164 : vector<1x128xf32> to vector<8x128xf32>
    %166 = arith.addf %163, %165 : vector<8x128xf32>
    %167 = arith.mulf %166, %166 : vector<8x128xf32>
    %168 = arith.mulf %166, %167 : vector<8x128xf32>
    %cst_56 = arith.constant 4.471500e-02 : f32
    %169 = vector.broadcast %cst_56 : f32 to vector<8x128xf32>
    %170 = arith.mulf %169, %168 : vector<8x128xf32>
    %171 = arith.addf %166, %170 : vector<8x128xf32>
    %cst_57 = arith.constant 0.797884583 : f32
    %172 = vector.broadcast %cst_57 : f32 to vector<8x128xf32>
    %173 = arith.mulf %172, %171 : vector<8x128xf32>
    %174 = math.tanh %173 : vector<8x128xf32>
    %cst_58 = arith.constant 1.000000e+00 : f32
    %175 = vector.broadcast %cst_58 : f32 to vector<8x128xf32>
    %176 = arith.addf %175, %174 : vector<8x128xf32>
    %cst_59 = arith.constant 5.000000e-01 : f32
    %177 = vector.broadcast %cst_59 : f32 to vector<8x128xf32>
    %178 = arith.mulf %177, %176 : vector<8x128xf32>
    %179 = arith.mulf %166, %178 : vector<8x128xf32>
    %c1_60 = arith.constant 1 : index
    %c256_61 = arith.constant 256 : index
    %c0_62 = arith.constant 0 : index
    %180 = vector.load %arg3[%c1_60, %c256_61, %c0_62] : memref<2x384x128xbf16, #tpu.memory_space<vmem>>, vector<1x128x128xbf16>
    %181 = vector.shape_cast %180 : vector<1x128x128xbf16> to vector<128x128xbf16>
    %182 = arith.truncf %179 : vector<8x128xf32> to vector<8x128xbf16>
    %cst_63 = arith.constant dense<0.000000e+00> : vector<8x128xf32>
    %183 = tpu.matmul %182, %181, %cst_63 {dimension_numbers = #tpu.dot_dimension_numbers<[1], [0], [0], [1], [0, 0, 1, 1], [], []>} : vector<8x128xbf16>, vector<128x128xbf16>, vector<8x128xf32> -> vector<8x128xf32>
    %184 = vector.extract_strided_slice %125 {offsets = [4, 0], sizes = [1, 128], strides = [1, 1]} : vector<8x128xf32> to vector<1x128xf32>
    %185 = vector.broadcast %184 : vector<1x128xf32> to vector<8x128xf32>
    %186 = arith.addf %183, %185 : vector<8x128xf32>
    %187 = arith.addf %186, %159 : vector<8x128xf32>
    %188 = vector.extract_strided_slice %125 {offsets = [5, 0], sizes = [1, 128], strides = [1, 1]} : vector<8x128xf32> to vector<1x128xf32>
    %189 = vector.extract_strided_slice %125 {offsets = [6, 0], sizes = [1, 128], strides = [1, 1]} : vector<8x128xf32> to vector<1x128xf32>
    %cst_64 = arith.constant dense<0.000000e+00> : vector<8xf32>
    %190 = vector.multi_reduction <add>, %187, %cst_64 [1] : vector<8x128xf32> to vector<8xf32>
    %191 = vector.shape_cast %190 : vector<8xf32> to vector<8x1xf32>
    %cst_65 = arith.constant 3.125000e-02 : f32
    %192 = vector.broadcast %cst_65 : f32 to vector<8x1xf32>
    %193 = arith.mulf %191, %192 : vector<8x1xf32>
    %194 = arith.mulf %187, %187 : vector<8x128xf32>
    %cst_66 = arith.constant dense<0.000000e+00> : vector<8xf32>
    %195 = vector.multi_reduction <add>, %194, %cst_66 [1] : vector<8x128xf32> to vector<8xf32>
    %196 = vector.shape_cast %195 : vector<8xf32> to vector<8x1xf32>
    %cst_67 = arith.constant 3.125000e-02 : f32
    %197 = vector.broadcast %cst_67 : f32 to vector<8x1xf32>
    %198 = arith.mulf %196, %197 : vector<8x1xf32>
    %199 = arith.mulf %193, %193 : vector<8x1xf32>
    %200 = arith.subf %198, %199 : vector<8x1xf32>
    %cst_68 = arith.constant 0.000000e+00 : f32
    %201 = vector.broadcast %cst_68 : f32 to vector<8x1xf32>
    %202 = arith.maximumf %200, %201 : vector<8x1xf32>
    %203 = vector.broadcast %193 : vector<8x1xf32> to vector<8x128xf32>
    %204 = arith.subf %187, %203 : vector<8x128xf32>
    %cst_69 = arith.constant 9.99999996E-13 : f32
    %205 = vector.broadcast %cst_69 : f32 to vector<8x1xf32>
    %206 = arith.addf %202, %205 : vector<8x1xf32>
    %207 = math.rsqrt %206 : vector<8x1xf32>
    %208 = vector.broadcast %207 : vector<8x1xf32> to vector<8x128xf32>
    %209 = arith.mulf %204, %208 : vector<8x128xf32>
    %210 = vector.broadcast %188 : vector<1x128xf32> to vector<8x128xf32>
    %211 = arith.mulf %209, %210 : vector<8x128xf32>
    %212 = vector.broadcast %189 : vector<1x128xf32> to vector<8x128xf32>
    %213 = arith.addf %211, %212 : vector<8x128xf32>
    %c48 = arith.constant 48 : index
    %c0_70 = arith.constant 0 : index
    %214 = vector.load %arg1[%c48, %c0_70] : memref<176x128xbf16, #tpu.memory_space<vmem>>, vector<128x128xbf16>
    %215 = arith.truncf %213 : vector<8x128xf32> to vector<8x128xbf16>
    %cst_71 = arith.constant dense<0.000000e+00> : vector<8x128xf32>
    %216 = tpu.matmul %215, %214, %cst_71 {dimension_numbers = #tpu.dot_dimension_numbers<[1], [0], [0], [1], [0, 0, 1, 1], [], []>} : vector<8x128xbf16>, vector<128x128xbf16>, vector<8x128xf32> -> vector<8x128xf32>
    %217 = vector.extract_strided_slice %0 {offsets = [3, 0], sizes = [1, 128], strides = [1, 1]} : vector<8x128xf32> to vector<1x128xf32>
    %218 = vector.broadcast %217 : vector<1x128xf32> to vector<8x128xf32>
    %219 = arith.addf %216, %218 : vector<8x128xf32>
    %220 = math.tanh %219 : vector<8x128xf32>
    %221 = vector.extract_strided_slice %0 {offsets = [4, 0], sizes = [1, 128], strides = [1, 1]} : vector<8x128xf32> to vector<1x128xf32>
    %222 = vector.broadcast %221 : vector<1x128xf32> to vector<8x128xf32>
    %223 = arith.mulf %220, %222 : vector<8x128xf32>
    %cst_72 = arith.constant dense<0.000000e+00> : vector<8xf32>
    %224 = vector.multi_reduction <add>, %223, %cst_72 [1] : vector<8x128xf32> to vector<8xf32>
    %225 = vector.shape_cast %224 : vector<8xf32> to vector<8x1xf32>
    %226 = vector.shape_cast %225 : vector<8x1xf32> to vector<8x1xf32>
    %227 = vector.broadcast %226 : vector<8x1xf32> to vector<8x128xf32>
    %228 = vector.extract_strided_slice %0 {offsets = [5, 0], sizes = [1, 128], strides = [1, 1]} : vector<8x128xf32> to vector<1x128xf32>
    %229 = vector.broadcast %228 : vector<1x128xf32> to vector<8x128xf32>
    %230 = arith.addf %227, %229 : vector<8x128xf32>
    %231 = arith.negf %230 : vector<8x128xf32>
    %232 = math.exp %231 : vector<8x128xf32>
    %cst_73 = arith.constant 1.000000e+00 : f32
    %233 = vector.broadcast %cst_73 : f32 to vector<8x128xf32>
    %234 = arith.addf %233, %232 : vector<8x128xf32>
    %235 = arith.divf %233, %234 : vector<8x128xf32>
    %c0_74 = arith.constant 0 : index
    %c0_75 = arith.constant 0 : index
    %236 = vector.load %arg5[%c0_74, %c0_75] : memref<8x128xf32, #tpu.memory_space<vmem>>, vector<8x128xf32>
    tpu.vector_store %arg5[%c0_74, %c0_75], %235 {strides = array<i32>} : memref<8x128xf32, #tpu.memory_space<vmem>>, vector<8x128xf32>,
    return
  }
}

</mosaic_0001>

<llo_original>
// kernel: model_scp_forward.1
$region0: #{model_scp_forward.1}
  #allocation0 [shape = 'u32[]', space=smem, size = 0x4, offset = 0x4, fixed_abs, tag = 'smem constant byte address 0x4 - core index']
  #allocation1 [shape = 'u32[72,128]{1,0:T(1,128)}', space=vmem, size = 0x9000, scoped, tag = 'internal scratch']
  %s0 = inlined_call_operand.vmem [shape: f32[8,48], index: 0, kind: input, shape index: {}]
  %s1 = inlined_call_operand.hbm [shape: bf16[176,128], index: 1, kind: input, shape index: {}]
  %s2 = inlined_call_operand.vmem [shape: f32[8,128], index: 2, kind: input, shape index: {}]
  %s3 = inlined_call_operand.hbm [shape: bf16[2,384,128], index: 3, kind: input, shape index: {}]
  %s4 = inlined_call_operand.hbm [shape: f32[2,8,128], index: 4, kind: input, shape index: {}]
  %s5 = inlined_call_operand.vmem [shape: f32[8,128], index: 5, kind: output, shape index: {}]
  %s6 = sld [smem:[#allocation0]]
  $region42: #{model_scp_forward.1} parent=0
    _
  %s8 = ssub.s32 1, %s6
  %s9 = scalar_select 0, %s8, %s6
  $region1: #{model_scp_forward.1} parent=0
    #allocation2 [shape = 'u8[45056]{0}', space=vmem, size = 0xb000, scoped, tag = 'input window, operand 1, single buffered']
    #allocation3 [shape = 's32[1]{0}', space=sflag, size = 0x4, scoped, tag = 'scoped memory for model_scp_forward.1']
    #allocation4 [shape = 'u8[196608]{0}', space=vmem, size = 0x30000, scoped, tag = 'input window, operand 3, single buffered']
    #allocation5 [shape = 's32[1]{0}', space=sflag, size = 0x4, scoped, tag = 'scoped memory for model_scp_forward.1']
    #allocation6 [shape = 'u8[8192]{0}', space=vmem, size = 0x2000, scoped, tag = 'input window, operand 4, single buffered']
    %10 = vsyncpa [#allocation3], 0
    %11 = vsyncpa [#allocation5], 0
    // Predicated region
    $region2: #{model_scp_forward.1} parent=1 // pred_check
      _
    $region3: #{model_scp_forward.1} parent=1 // pred_check_branch
      %13 = sbr.rel (0) target = $region5
    $region4: #{model_scp_forward.1} parent=1 // pred_region
      _
    $region5: #{model_scp_forward.1} parent=1 // pred_fallthru
      _
    // Predicated region
    $region6: #{model_scp_forward.1} parent=1 // pred_check
      _
    $region7: #{model_scp_forward.1} parent=1 // pred_check_branch
      %15 = sbr.rel (0) target = $region9
    $region8: #{model_scp_forward.1} parent=1 // pred_region
      %17 = vsyncadd [#allocation3], 0
      %s18 = sshll.u32 %s1, 4
      %s19 = int_to_ptr.hbm [resolvable:$true] %s18
      %s20 = sshll.u32 [#allocation2], 4
      %s21 = int_to_ptr.vmem [resolvable:$true] %s20
      %26 = dma.hbm_to_vmem [thread:$0]  %s19, 1408, %s21, [#allocation3], 64, 64, 4
    $region9: #{model_scp_forward.1} parent=1 // pred_fallthru
      _
    // Predicated region
    $region10: #{model_scp_forward.1} parent=1 // pred_check
      _
    $region11: #{model_scp_forward.1} parent=1 // pred_check_branch
      %28 = sbr.rel (0) target = $region13
    $region12: #{model_scp_forward.1} parent=1 // pred_region
      _
    $region13: #{model_scp_forward.1} parent=1 // pred_fallthru
      _
    // Predicated region
    $region14: #{model_scp_forward.1} parent=1 // pred_check
      _
    $region15: #{model_scp_forward.1} parent=1 // pred_check_branch
      %30 = sbr.rel (0) target = $region17
    $region16: #{model_scp_forward.1} parent=1 // pred_region
      %32 = vsyncadd [#allocation5], 0
      %s33 = sshll.u32 %s3, 4
      %s34 = int_to_ptr.hbm [resolvable:$true] %s33
      %s35 = sshll.u32 [#allocation4], 4
      %s36 = int_to_ptr.vmem [resolvable:$true] %s35
      %41 = dma.hbm_to_vmem [thread:$0]  %s34, 6144, %s36, [#allocation5], 64, 64, 4
    $region17: #{model_scp_forward.1} parent=1 // pred_fallthru
      _
    // Predicated region
    $region18: #{model_scp_forward.1} parent=1 // pred_check
      _
    $region19: #{model_scp_forward.1} parent=1 // pred_check_branch
      %43 = sbr.rel (0) target = $region21
    $region20: #{model_scp_forward.1} parent=1 // pred_region
      %45 = vsyncadd [#allocation5], 0
      %s46 = sshll.u32 %s4, 4
      %s47 = int_to_ptr.hbm [resolvable:$true] %s46
      %s48 = sshll.u32 [#allocation6], 4
      %s49 = int_to_ptr.vmem [resolvable:$true] %s48
      %54 = dma.hbm_to_vmem [thread:$0]  %s47, 256, %s49, [#allocation5], 128, 128, 8
    $region21: #{model_scp_forward.1} parent=1 // pred_fallthru
      _
    // Predicated region
    $region22: #{model_scp_forward.1} parent=1 // pred_check
      _
    $region23: #{model_scp_forward.1} parent=1 // pred_check_branch
      %56 = sbr.rel (0) target = $region25
    $region24: #{model_scp_forward.1} parent=1 // pred_region
      %58 = dma.done [#allocation3], 1408
    $region25: #{model_scp_forward.1} parent=1 // pred_fallthru
      _
    // Predicated region
    $region26: #{model_scp_forward.1} parent=1 // pred_check
      _
    $region27: #{model_scp_forward.1} parent=1 // pred_check_branch
      %60 = sbr.rel (0) target = $region29
    $region28: #{model_scp_forward.1} parent=1 // pred_region
      %62 = dma.done [#allocation5], 6144
    $region29: #{model_scp_forward.1} parent=1 // pred_fallthru
      _
    // Predicated region
    $region30: #{model_scp_forward.1} parent=1 // pred_check
      _
    $region31: #{model_scp_forward.1} parent=1 // pred_check_branch
      %64 = sbr.rel (0) target = $region33
    $region32: #{model_scp_forward.1} parent=1 // pred_region
      %66 = dma.done [#allocation5], 256
    $region33: #{model_scp_forward.1} parent=1 // pred_fallthru
      _
    %v68 = vld [vmem:[%s2] sm:$0xff]
    %v69 = vld [vmem:[%s0] sm:$0xff]
    %v70 = vld [vmem:[#allocation2] sm:$0xf]
    %v71 = vld [vmem:[#allocation2 + $0x4] sm:$0xf]
    %v72 = vld [vmem:[#allocation2 + $0x8] sm:$0xf]
    %v73 = vld [vmem:[#allocation2 + $0xc] sm:$0xf]
    %v74 = vld [vmem:[#allocation2 + $0x10] sm:$0xf]
    %v75 = vld [vmem:[#allocation2 + $0x14] sm:$0xf]
    %v76 = vpack.c.bf16 %v69, %v69
    %v77 = vperm.slane %v68, 0
    %v84 = vunpack.c.l.b16 %v70
    %v85 = vunpack.c.l.b16 %v71
    %v86 = vunpack.c.l.b16 %v72
    %v87 = vunpack.c.l.b16 %v73
    %v88 = vunpack.c.l.b16 %v74
    %v89 = vunpack.c.l.b16 %v75
    %v90 = vpack.c.b16 %v85, %v84
    %v91 = vpack.c.b16 %v87, %v86
    %v92 = vpack.c.b16 %v89, %v88
    %vm96 = vcmask 392192
    %v98 = vsel %vm96, %v76, 0
    %100 = vmatpush.bf16.msra.mxu0 0
    %101 = vmatpush.bf16.msra.mxu0 0
    %102 = vmatpush.bf16.msra.mxu0 0
    %103 = vmatpush.bf16.msra.mxu0 0
    %104 = vmatpush.bf16.msra.mxu0 0
    %105 = vmatpush.bf16.msra.mxu0 %v92
    %106 = vmatpush.bf16.msra.mxu0 %v91
    %107 = vmatpush.bf16.msra.mxu0 %v90
    %108 = vmatmul.bf16.gmra.mxu0 %v98
    %v109 = vpop.f32.mrf.mxu0
    %v110 = vadd.f32 %v77, %v109
    %v111 = vpop.f32.mrf.mxu0
    %112 = vdwg.mxu0
    %113 = vadd.xlane.f32.xlu0 %v110
    %v114 = vpop.xlane.xlu0 %113
    %v115 = vmul.f32 %v114, 0.03125
    %v116 = vmul.f32 %v110, %v110
    %117 = vadd.xlane.f32.xlu0 %v116
    %v118 = vpop.xlane.xlu0 %117
    %v119 = vmul.f32 %v118, 0.03125
    %v120 = vmul.f32 %v115, %v115
    %v121 = vsub.f32 %v119, %v120
    %v122 = vmax.f32 %v121, 0.0
    %v123 = vsub.f32 %v110, %v115
    %v124 = vadd.f32 %v122, 1e-12
    %v125 = vrsqrt.pop %v124
    %v126 = vmul.f32 %v125, %v124
    %v127 = vmul.f32 %v126, %v125
    %v128 = vmul.f32 0.5, %v127
    %v129 = vsub.f32 1.5, %v128
    %v130 = vmul.f32 %v125, %v129
    %vm131 = vweird.f32 %v124
    %vm132 = vweird.f32 %v125
    %vm133 = vmor %vm131, %vm132
    %v134 = vsel %vm133, %v125, %v130
    %v135 = vmul.f32 %v123, %v134
    %v136 = vperm.slane %v68, 1
    %v137 = vmul.f32 %v135, %v136
    %v138 = vperm.slane %v68, 2
    %v139 = vadd.f32 %v137, %v138
    %v140 = vld [vmem:[#allocation6] sm:$0xff]
    %v141 = vld [vmem:[#allocation4] sm:$0xf]
    %v142 = vld [vmem:[#allocation4 + $0x4] sm:$0xf]
    %v143 = vld [vmem:[#allocation4 + $0x8] sm:$0xf]
    %v144 = vld [vmem:[#allocation4 + $0xc] sm:$0xf]
    %v145 = vld [vmem:[#allocation4 + $0x10] sm:$0xf]
    %v146 = vld [vmem:[#allocation4 + $0x14] sm:$0xf]
    %v147 = vld [vmem:[#allocation4 + $0x18] sm:$0xf]
    %v148 = vld [vmem:[#allocation4 + $0x1c] sm:$0xf]
    %v149 = vld [vmem:[#allocation4 + $0x20] sm:$0xf]
    %v150 = vld [vmem:[#allocation4 + $0x24] sm:$0xf]
    %v151 = vld [vmem:[#allocation4 + $0x28] sm:$0xf]
    %v152 = vld [vmem:[#allocation4 + $0x2c] sm:$0xf]
    %v153 = vld [vmem:[#allocation4 + $0x30] sm:$0xf]
    %v154 = vld [vmem:[#allocation4 + $0x34] sm:$0xf]
    %v155 = vld [vmem:[#allocation4 + $0x38] sm:$0xf]
    %v156 = vld [vmem:[#allocation4 + $0x3c] sm:$0xf]
    %v157 = vpack.c.bf16 %v139, %v139
    %v158 = vperm.slane %v140, 0
    %v175 = vunpack.c.l.b16 %v141
    %v176 = vunpack.c.l.b16 %v142
    %v177 = vunpack.c.l.b16 %v143
    %v178 = vunpack.c.l.b16 %v144
    %v179 = vunpack.c.l.b16 %v145
    %v180 = vunpack.c.l.b16 %v146
    %v181 = vunpack.c.l.b16 %v147
    %v182 = vunpack.c.l.b16 %v148
    %v183 = vunpack.c.l.b16 %v149
    %v184 = vunpack.c.l.b16 %v150
    %v185 = vunpack.c.l.b16 %v151
    %v186 = vunpack.c.l.b16 %v152
    %v187 = vunpack.c.l.b16 %v153
    %v188 = vunpack.c.l.b16 %v154
    %v189 = vunpack.c.l.b16 %v155
    %v190 = vunpack.c.l.b16 %v156
    %v191 = vpack.c.b16 %v176, %v175
    %v192 = vpack.c.b16 %v178, %v177
    %v193 = vpack.c.b16 %v180, %v179
    %v194 = vpack.c.b16 %v182, %v181
    %v195 = vpack.c.b16 %v184, %v183
    %v196 = vpack.c.b16 %v186, %v185
    %v197 = vpack.c.b16 %v188, %v187
    %v198 = vpack.c.b16 %v190, %v189
    %207 = vmatpush.bf16.msra.mxu0 %v198
    %208 = vmatpush.bf16.msra.mxu0 %v197
    %209 = vmatpush.bf16.msra.mxu0 %v196
    %210 = vmatpush.bf16.msra.mxu0 %v195
    %211 = vmatpush.bf16.msra.mxu0 %v194
    %212 = vmatpush.bf16.msra.mxu0 %v193
    %213 = vmatpush.bf16.msra.mxu0 %v192
    %214 = vmatpush.bf16.msra.mxu0 %v191
    %215 = vmatmul.bf16.gmra.mxu0 %v157
    %v216 = vpop.f32.mrf.mxu0
    %v217 = vadd.f32 %v158, %v216
    %v218 = vpop.f32.mrf.mxu0
    %219 = vdwg.mxu0
    %v220 = vadd.f32 %v217, %v139
    %221 = vadd.xlane.f32.xlu0 %v220
    %v222 = vpop.xlane.xlu0 %221
    %v223 = vmul.f32 %v222, 0.03125
    %v224 = vmul.f32 %v220, %v220
    %225 = vadd.xlane.f32.xlu0 %v224
    %v226 = vpop.xlane.xlu0 %225
    %v227 = vmul.f32 %v226, 0.03125
    %v228 = vmul.f32 %v223, %v223
    %v229 = vsub.f32 %v227, %v228
    %v230 = vmax.f32 %v229, 0.0
    %v231 = vsub.f32 %v220, %v223
    %v232 = vadd.f32 %v230, 1e-12
    %v233 = vrsqrt.pop %v232
    %v234 = vmul.f32 %v233, %v232
    %v235 = vmul.f32 %v234, %v233
    %v236 = vmul.f32 0.5, %v235
    %v237 = vsub.f32 1.5, %v236
    %v238 = vmul.f32 %v233, %v237
    %vm239 = vweird.f32 %v232
    %vm240 = vweird.f32 %v233
    %vm241 = vmor %vm239, %vm240
    %v242 = vsel %vm241, %v233, %v238
    %v243 = vmul.f32 %v231, %v242
    %v244 = vperm.slane %v140, 1
    %v245 = vmul.f32 %v243, %v244
    %v246 = vperm.slane %v140, 2
    %v247 = vadd.f32 %v245, %v246
    %v248 = vld [vmem:[#allocation4 + $0x40] sm:$0xf]
    %v249 = vld [vmem:[#allocation4 + $0x44] sm:$0xf]
    %v250 = vld [vmem:[#allocation4 + $0x48] sm:$0xf]
    %v251 = vld [vmem:[#allocation4 + $0x4c] sm:$0xf]
    %v252 = vld [vmem:[#allocation4 + $0x50] sm:$0xf]
    %v253 = vld [vmem:[#allocation4 + $0x54] sm:$0xf]
    %v254 = vld [vmem:[#allocation4 + $0x58] sm:$0xf]
    %v255 = vld [vmem:[#allocation4 + $0x5c] sm:$0xf]
    %v256 = vld [vmem:[#allocation4 + $0x60] sm:$0xf]
    %v257 = vld [vmem:[#allocation4 + $0x64] sm:$0xf]
    %v258 = vld [vmem:[#allocation4 + $0x68] sm:$0xf]
    %v259 = vld [vmem:[#allocation4 + $0x6c] sm:$0xf]
    %v260 = vld [vmem:[#allocation4 + $0x70] sm:$0xf]
    %v261 = vld [vmem:[#allocation4 + $0x74] sm:$0xf]
    %v262 = vld [vmem:[#allocation4 + $0x78] sm:$0xf]
    %v263 = vld [vmem:[#allocation4 + $0x7c] sm:$0xf]
    %v264 = vpack.c.bf16 %v247, %v247
    %v265 = vperm.slane %v140, 3
    %v282 = vunpack.c.l.b16 %v248
    %v283 = vunpack.c.l.b16 %v249
    %v284 = vunpack.c.l.b16 %v250
    %v285 = vunpack.c.l.b16 %v251
    %v286 = vunpack.c.l.b16 %v252
    %v287 = vunpack.c.l.b16 %v253
    %v288 = vunpack.c.l.b16 %v254
    %v289 = vunpack.c.l.b16 %v255
    %v290 = vunpack.c.l.b16 %v256
    %v291 = vunpack.c.l.b16 %v257
    %v292 = vunpack.c.l.b16 %v258
    %v293 = vunpack.c.l.b16 %v259
    %v294 = vunpack.c.l.b16 %v260
    %v295 = vunpack.c.l.b16 %v261
    %v296 = vunpack.c.l.b16 %v262
    %v297 = vunpack.c.l.b16 %v263
    %v298 = vpack.c.b16 %v283, %v282
    %v299 = vpack.c.b16 %v285, %v284
    %v300 = vpack.c.b16 %v287, %v286
    %v301 = vpack.c.b16 %v289, %v288
    %v302 = vpack.c.b16 %v291, %v290
    %v303 = vpack.c.b16 %v293, %v292
    %v304 = vpack.c.b16 %v295, %v294
    %v305 = vpack.c.b16 %v297, %v296
    %314 = vmatpush.bf16.msra.mxu0 %v305
    %315 = vmatpush.bf16.msra.mxu0 %v304
    %316 = vmatpush.bf16.msra.mxu0 %v303
    %317 = vmatpush.bf16.msra.mxu0 %v302
    %318 = vmatpush.bf16.msra.mxu0 %v301
    %319 = vmatpush.bf16.msra.mxu0 %v300
    %320 = vmatpush.bf16.msra.mxu0 %v299
    %321 = vmatpush.bf16.msra.mxu0 %v298
    %322 = vmatmul.bf16.gmra.mxu0 %v264
    %v323 = vpop.f32.mrf.mxu0
    %v324 = vadd.f32 %v265, %v323
    %v325 = vpop.f32.mrf.mxu0
    %326 = vdwg.mxu0
    %v327 = vmul.f32 %v324, %v324
    %v328 = vmul.f32 %v324, %v327
    %v329 = vmul.f32 %v328, 0.044715
    %v330 = vadd.f32 %v324, %v329
    %v331 = vmul.f32 %v330, 0.7978846
    %v332 = vtanh.pop %v331
    %v333 = vadd.f32 %v332, 1.0
    %v334 = vmul.f32 %v333, 0.5
    %v335 = vmul.f32 %v324, %v334
    %v336 = vld [vmem:[#allocation4 + $0x80] sm:$0xf]
    %v337 = vld [vmem:[#allocation4 + $0x84] sm:$0xf]
    %v338 = vld [vmem:[#allocation4 + $0x88] sm:$0xf]
    %v339 = vld [vmem:[#allocation4 + $0x8c] sm:$0xf]
    %v340 = vld [vmem:[#allocation4 + $0x90] sm:$0xf]
    %v341 = vld [vmem:[#allocation4 + $0x94] sm:$0xf]
    %v342 = vld [vmem:[#allocation4 + $0x98] sm:$0xf]
    %v343 = vld [vmem:[#allocation4 + $0x9c] sm:$0xf]
    %v344 = vld [vmem:[#allocation4 + $0xa0] sm:$0xf]
    %v345 = vld [vmem:[#allocation4 + $0xa4] sm:$0xf]
    %v346 = vld [vmem:[#allocation4 + $0xa8] sm:$0xf]
    %v347 = vld [vmem:[#allocation4 + $0xac] sm:$0xf]
    %v348 = vld [vmem:[#allocation4 + $0xb0] sm:$0xf]
    %v349 = vld [vmem:[#allocation4 + $0xb4] sm:$0xf]
    %v350 = vld [vmem:[#allocation4 + $0xb8] sm:$0xf]
    %v351 = vld [vmem:[#allocation4 + $0xbc] sm:$0xf]
    %v352 = vpack.c.bf16 %v335, %v335
    %v353 = vperm.slane %v140, 4
    %v370 = vunpack.c.l.b16 %v336
    %v371 = vunpack.c.l.b16 %v337
    %v372 = vunpack.c.l.b16 %v338
    %v373 = vunpack.c.l.b16 %v339
    %v374 = vunpack.c.l.b16 %v340
    %v375 = vunpack.c.l.b16 %v341
    %v376 = vunpack.c.l.b16 %v342
    %v377 = vunpack.c.l.b16 %v343
    %v378 = vunpack.c.l.b16 %v344
    %v379 = vunpack.c.l.b16 %v345
    %v380 = vunpack.c.l.b16 %v346
    %v381 = vunpack.c.l.b16 %v347
    %v382 = vunpack.c.l.b16 %v348
    %v383 = vunpack.c.l.b16 %v349
    %v384 = vunpack.c.l.b16 %v350
    %v385 = vunpack.c.l.b16 %v351
    %v386 = vpack.c.b16 %v371, %v370
    %v387 = vpack.c.b16 %v373, %v372
    %v388 = vpack.c.b16 %v375, %v374
    %v389 = vpack.c.b16 %v377, %v376
    %v390 = vpack.c.b16 %v379, %v378
    %v391 = vpack.c.b16 %v381, %v380
    %v392 = vpack.c.b16 %v383, %v382
    %v393 = vpack.c.b16 %v385, %v384
    %402 = vmatpush.bf16.msra.mxu0 %v393
    %403 = vmatpush.bf16.msra.mxu0 %v392
    %404 = vmatpush.bf16.msra.mxu0 %v391
    %405 = vmatpush.bf16.msra.mxu0 %v390
    %406 = vmatpush.bf16.msra.mxu0 %v389
    %407 = vmatpush.bf16.msra.mxu0 %v388
    %408 = vmatpush.bf16.msra.mxu0 %v387
    %409 = vmatpush.bf16.msra.mxu0 %v386
    %410 = vmatmul.bf16.gmra.mxu0 %v352
    %v411 = vpop.f32.mrf.mxu0
    %v412 = vadd.f32 %v353, %v411
    %v413 = vpop.f32.mrf.mxu0
    %414 = vdwg.mxu0
    %v415 = vadd.f32 %v412, %v247
    %416 = vadd.xlane.f32.xlu0 %v415
    %v417 = vpop.xlane.xlu0 %416
    %v418 = vmul.f32 %v417, 0.03125
    %v419 = vmul.f32 %v415, %v415
    %420 = vadd.xlane.f32.xlu0 %v419
    %v421 = vpop.xlane.xlu0 %420
    %v422 = vmul.f32 %v421, 0.03125
    %v423 = vmul.f32 %v418, %v418
    %v424 = vsub.f32 %v422, %v423
    %v425 = vmax.f32 %v424, 0.0
    %v426 = vsub.f32 %v415, %v418
    %v427 = vadd.f32 %v425, 1e-12
    %v428 = vrsqrt.pop %v427
    %v429 = vmul.f32 %v428, %v427
    %v430 = vmul.f32 %v429, %v428
    %v431 = vmul.f32 0.5, %v430
    %v432 = vsub.f32 1.5, %v431
    %v433 = vmul.f32 %v428, %v432
    %vm434 = vweird.f32 %v427
    %vm435 = vweird.f32 %v428
    %vm436 = vmor %vm434, %vm435
    %v437 = vsel %vm436, %v428, %v433
    %v438 = vmul.f32 %v426, %v437
    %v439 = vperm.slane %v140, 5
    %v440 = vmul.f32 %v438, %v439
    %v441 = vperm.slane %v140, 6
    %v442 = vadd.f32 %v440, %v441
    %s443 = scalar_lea.vmem [#allocation6], 8
    %v444 = vld [vmem:[%s443] sm:$0xff]
    %s445 = scalar_lea.vmem [#allocation4], 192
    %v446 = vld [vmem:[%s445] sm:$0xf]
    %v447 = vld [vmem:[%s445 + $0x4] sm:$0xf]
    %v448 = vld [vmem:[%s445 + $0x8] sm:$0xf]
    %v449 = vld [vmem:[%s445 + $0xc] sm:$0xf]
    %v450 = vld [vmem:[%s445 + $0x10] sm:$0xf]
    %v451 = vld [vmem:[%s445 + $0x14] sm:$0xf]
    %v452 = vld [vmem:[%s445 + $0x18] sm:$0xf]
    %v453 = vld [vmem:[%s445 + $0x1c] sm:$0xf]
    %v454 = vld [vmem:[%s445 + $0x20] sm:$0xf]
    %v455 = vld [vmem:[%s445 + $0x24] sm:$0xf]
    %v456 = vld [vmem:[%s445 + $0x28] sm:$0xf]
    %v457 = vld [vmem:[%s445 + $0x2c] sm:$0xf]
    %v458 = vld [vmem:[%s445 + $0x30] sm:$0xf]
    %v459 = vld [vmem:[%s445 + $0x34] sm:$0xf]
    %v460 = vld [vmem:[%s445 + $0x38] sm:$0xf]
    %v461 = vld [vmem:[%s445 + $0x3c] sm:$0xf]
    %v462 = vpack.c.bf16 %v442, %v442
    %v463 = vperm.slane %v444, 0
    %v480 = vunpack.c.l.b16 %v446
    %v481 = vunpack.c.l.b16 %v447
    %v482 = vunpack.c.l.b16 %v448
    %v483 = vunpack.c.l.b16 %v449
    %v484 = vunpack.c.l.b16 %v450
    %v485 = vunpack.c.l.b16 %v451
    %v486 = vunpack.c.l.b16 %v452
    %v487 = vunpack.c.l.b16 %v453
    %v488 = vunpack.c.l.b16 %v454
    %v489 = vunpack.c.l.b16 %v455
    %v490 = vunpack.c.l.b16 %v456
    %v491 = vunpack.c.l.b16 %v457
    %v492 = vunpack.c.l.b16 %v458
    %v493 = vunpack.c.l.b16 %v459
    %v494 = vunpack.c.l.b16 %v460
    %v495 = vunpack.c.l.b16 %v461
    %v496 = vpack.c.b16 %v481, %v480
    %v497 = vpack.c.b16 %v483, %v482
    %v498 = vpack.c.b16 %v485, %v484
    %v499 = vpack.c.b16 %v487, %v486
    %v500 = vpack.c.b16 %v489, %v488
    %v501 = vpack.c.b16 %v491, %v490
    %v502 = vpack.c.b16 %v493, %v492
    %v503 = vpack.c.b16 %v495, %v494
    %512 = vmatpush.bf16.msra.mxu0 %v503
    %513 = vmatpush.bf16.msra.mxu0 %v502
    %514 = vmatpush.bf16.msra.mxu0 %v501
    %515 = vmatpush.bf16.msra.mxu0 %v500
    %516 = vmatpush.bf16.msra.mxu0 %v499
    %517 = vmatpush.bf16.msra.mxu0 %v498
    %518 = vmatpush.bf16.msra.mxu0 %v497
    %519 = vmatpush.bf16.msra.mxu0 %v496
    %520 = vmatmul.bf16.gmra.mxu0 %v462
    %v521 = vpop.f32.mrf.mxu0
    %v522 = vadd.f32 %v463, %v521
    %v523 = vpop.f32.mrf.mxu0
    %524 = vdwg.mxu0
    %v525 = vadd.f32 %v522, %v442
    %526 = vadd.xlane.f32.xlu0 %v525
    %v527 = vpop.xlane.xlu0 %526
    %v528 = vmul.f32 %v527, 0.03125
    %v529 = vmul.f32 %v525, %v525
    %530 = vadd.xlane.f32.xlu0 %v529
    %v531 = vpop.xlane.xlu0 %530
    %v532 = vmul.f32 %v531, 0.03125
    %v533 = vmul.f32 %v528, %v528
    %v534 = vsub.f32 %v532, %v533
    %v535 = vmax.f32 %v534, 0.0
    %v536 = vsub.f32 %v525, %v528
    %v537 = vadd.f32 %v535, 1e-12
    %v538 = vrsqrt.pop %v537
    %v539 = vmul.f32 %v538, %v537
    %v540 = vmul.f32 %v539, %v538
    %v541 = vmul.f32 0.5, %v540
    %v542 = vsub.f32 1.5, %v541
    %v543 = vmul.f32 %v538, %v542
    %vm544 = vweird.f32 %v537
    %vm545 = vweird.f32 %v538
    %vm546 = vmor %vm544, %vm545
    %v547 = vsel %vm546, %v538, %v543
    %v548 = vmul.f32 %v536, %v547
    %v549 = vperm.slane %v444, 1
    %v550 = vmul.f32 %v548, %v549
    %v551 = vperm.slane %v444, 2
    %v552 = vadd.f32 %v550, %v551
    %v553 = vld [vmem:[%s445 + $0x40] sm:$0xf]
    %v554 = vld [vmem:[%s445 + $0x44] sm:$0xf]
    %v555 = vld [vmem:[%s445 + $0x48] sm:$0xf]
    %v556 = vld [vmem:[%s445 + $0x4c] sm:$0xf]
    %v557 = vld [vmem:[%s445 + $0x50] sm:$0xf]
    %v558 = vld [vmem:[%s445 + $0x54] sm:$0xf]
    %v559 = vld [vmem:[%s445 + $0x58] sm:$0xf]
    %v560 = vld [vmem:[%s445 + $0x5c] sm:$0xf]
    %v561 = vld [vmem:[%s445 + $0x60] sm:$0xf]
    %v562 = vld [vmem:[%s445 + $0x64] sm:$0xf]
    %v563 = vld [vmem:[%s445 + $0x68] sm:$0xf]
    %v564 = vld [vmem:[%s445 + $0x6c] sm:$0xf]
    %v565 = vld [vmem:[%s445 + $0x70] sm:$0xf]
    %v566 = vld [vmem:[%s445 + $0x74] sm:$0xf]
    %v567 = vld [vmem:[%s445 + $0x78] sm:$0xf]
    %v568 = vld [vmem:[%s445 + $0x7c] sm:$0xf]
    %v569 = vpack.c.bf16 %v552, %v552
    %v570 = vperm.slane %v444, 3
    %v587 = vunpack.c.l.b16 %v553
    %v588 = vunpack.c.l.b16 %v554
    %v589 = vunpack.c.l.b16 %v555
    %v590 = vunpack.c.l.b16 %v556
    %v591 = vunpack.c.l.b16 %v557
    %v592 = vunpack.c.l.b16 %v558
    %v593 = vunpack.c.l.b16 %v559
    %v594 = vunpack.c.l.b16 %v560
    %v595 = vunpack.c.l.b16 %v561
    %v596 = vunpack.c.l.b16 %v562
    %v597 = vunpack.c.l.b16 %v563
    %v598 = vunpack.c.l.b16 %v564
    %v599 = vunpack.c.l.b16 %v565
    %v600 = vunpack.c.l.b16 %v566
    %v601 = vunpack.c.l.b16 %v567
    %v602 = vunpack.c.l.b16 %v568
    %v603 = vpack.c.b16 %v588, %v587
    %v604 = vpack.c.b16 %v590, %v589
    %v605 = vpack.c.b16 %v592, %v591
    %v606 = vpack.c.b16 %v594, %v593
    %v607 = vpack.c.b16 %v596, %v595
    %v608 = vpack.c.b16 %v598, %v597
    %v609 = vpack.c.b16 %v600, %v599
    %v610 = vpack.c.b16 %v602, %v601
    %619 = vmatpush.bf16.msra.mxu0 %v610
    %620 = vmatpush.bf16.msra.mxu0 %v609
    %621 = vmatpush.bf16.msra.mxu0 %v608
    %622 = vmatpush.bf16.msra.mxu0 %v607
    %623 = vmatpush.bf16.msra.mxu0 %v606
    %624 = vmatpush.bf16.msra.mxu0 %v605
    %625 = vmatpush.bf16.msra.mxu0 %v604
    %626 = vmatpush.bf16.msra.mxu0 %v603
    %627 = vmatmul.bf16.gmra.mxu0 %v569
    %v628 = vpop.f32.mrf.mxu0
    %v629 = vadd.f32 %v570, %v628
    %v630 = vpop.f32.mrf.mxu0
    %631 = vdwg.mxu0
    %v632 = vmul.f32 %v629, %v629
    %v633 = vmul.f32 %v629, %v632
    %v634 = vmul.f32 %v633, 0.044715
    %v635 = vadd.f32 %v629, %v634
    %v636 = vmul.f32 %v635, 0.7978846
    %v637 = vtanh.pop %v636
    %v638 = vadd.f32 %v637, 1.0
    %v639 = vmul.f32 %v638, 0.5
    %v640 = vmul.f32 %v629, %v639
    %v641 = vld [vmem:[%s445 + $0x80] sm:$0xf]
    %v642 = vld [vmem:[%s445 + $0x84] sm:$0xf]
    %v643 = vld [vmem:[%s445 + $0x88] sm:$0xf]
    %v644 = vld [vmem:[%s445 + $0x8c] sm:$0xf]
    %v645 = vld [vmem:[%s445 + $0x90] sm:$0xf]
    %v646 = vld [vmem:[%s445 + $0x94] sm:$0xf]
    %v647 = vld [vmem:[%s445 + $0x98] sm:$0xf]
    %v648 = vld [vmem:[%s445 + $0x9c] sm:$0xf]
    %v649 = vld [vmem:[%s445 + $0xa0] sm:$0xf]
    %v650 = vld [vmem:[%s445 + $0xa4] sm:$0xf]
    %v651 = vld [vmem:[%s445 + $0xa8] sm:$0xf]
    %v652 = vld [vmem:[%s445 + $0xac] sm:$0xf]
    %v653 = vld [vmem:[%s445 + $0xb0] sm:$0xf]
    %v654 = vld [vmem:[%s445 + $0xb4] sm:$0xf]
    %v655 = vld [vmem:[%s445 + $0xb8] sm:$0xf]
    %v656 = vld [vmem:[%s445 + $0xbc] sm:$0xf]
    %v657 = vpack.c.bf16 %v640, %v640
    %v658 = vperm.slane %v444, 4
    %v675 = vunpack.c.l.b16 %v641
    %v676 = vunpack.c.l.b16 %v642
    %v677 = vunpack.c.l.b16 %v643
    %v678 = vunpack.c.l.b16 %v644
    %v679 = vunpack.c.l.b16 %v645
    %v680 = vunpack.c.l.b16 %v646
    %v681 = vunpack.c.l.b16 %v647
    %v682 = vunpack.c.l.b16 %v648
    %v683 = vunpack.c.l.b16 %v649
    %v684 = vunpack.c.l.b16 %v650
    %v685 = vunpack.c.l.b16 %v651
    %v686 = vunpack.c.l.b16 %v652
    %v687 = vunpack.c.l.b16 %v653
    %v688 = vunpack.c.l.b16 %v654
    %v689 = vunpack.c.l.b16 %v655
    %v690 = vunpack.c.l.b16 %v656
    %v691 = vpack.c.b16 %v676, %v675
    %v692 = vpack.c.b16 %v678, %v677
    %v693 = vpack.c.b16 %v680, %v679
    %v694 = vpack.c.b16 %v682, %v681
    %v695 = vpack.c.b16 %v684, %v683
    %v696 = vpack.c.b16 %v686, %v685
    %v697 = vpack.c.b16 %v688, %v687
    %v698 = vpack.c.b16 %v690, %v689
    %707 = vmatpush.bf16.msra.mxu0 %v698
    %708 = vmatpush.bf16.msra.mxu0 %v697
    %709 = vmatpush.bf16.msra.mxu0 %v696
    %710 = vmatpush.bf16.msra.mxu0 %v695
    %711 = vmatpush.bf16.msra.mxu0 %v694
    %712 = vmatpush.bf16.msra.mxu0 %v693
    %713 = vmatpush.bf16.msra.mxu0 %v692
    %714 = vmatpush.bf16.msra.mxu0 %v691
    %715 = vmatmul.bf16.gmra.mxu0 %v657
    %v716 = vpop.f32.mrf.mxu0
    %v717 = vadd.f32 %v658, %v716
    %v718 = vpop.f32.mrf.mxu0
    %719 = vdwg.mxu0
    %v720 = vadd.f32 %v717, %v552
    %721 = vadd.xlane.f32.xlu0 %v720
    %v722 = vpop.xlane.xlu0 %721
    %v723 = vmul.f32 %v722, 0.03125
    %v724 = vmul.f32 %v720, %v720
    %725 = vadd.xlane.f32.xlu0 %v724
    %v726 = vpop.xlane.xlu0 %725
    %v727 = vmul.f32 %v726, 0.03125
    %v728 = vmul.f32 %v723, %v723
    %v729 = vsub.f32 %v727, %v728
    %v730 = vmax.f32 %v729, 0.0
    %v731 = vsub.f32 %v720, %v723
    %v732 = vadd.f32 %v730, 1e-12
    %v733 = vrsqrt.pop %v732
    %v734 = vmul.f32 %v733, %v732
    %v735 = vmul.f32 %v734, %v733
    %v736 = vmul.f32 0.5, %v735
    %v737 = vsub.f32 1.5, %v736
    %v738 = vmul.f32 %v733, %v737
    %vm739 = vweird.f32 %v732
    %vm740 = vweird.f32 %v733
    %vm741 = vmor %vm739, %vm740
    %v742 = vsel %vm741, %v733, %v738
    %v743 = vmul.f32 %v731, %v742
    %v744 = vperm.slane %v444, 5
    %v745 = vmul.f32 %v743, %v744
    %v746 = vperm.slane %v444, 6
    %v747 = vadd.f32 %v745, %v746
    %v748 = vld [vmem:[#allocation2 + $0x18] sm:$0xf]
    %v749 = vld [vmem:[#allocation2 + $0x1c] sm:$0xf]
    %v750 = vld [vmem:[#allocation2 + $0x20] sm:$0xf]
    %v751 = vld [vmem:[#allocation2 + $0x24] sm:$0xf]
    %v752 = vld [vmem:[#allocation2 + $0x28] sm:$0xf]
    %v753 = vld [vmem:[#allocation2 + $0x2c] sm:$0xf]
    %v754 = vld [vmem:[#allocation2 + $0x30] sm:$0xf]
    %v755 = vld [vmem:[#allocation2 + $0x34] sm:$0xf]
    %v756 = vld [vmem:[#allocation2 + $0x38] sm:$0xf]
    %v757 = vld [vmem:[#allocation2 + $0x3c] sm:$0xf]
    %v758 = vld [vmem:[#allocation2 + $0x40] sm:$0xf]
    %v759 = vld [vmem:[#allocation2 + $0x44] sm:$0xf]
    %v760 = vld [vmem:[#allocation2 + $0x48] sm:$0xf]
    %v761 = vld [vmem:[#allocation2 + $0x4c] sm:$0xf]
    %v762 = vld [vmem:[#allocation2 + $0x50] sm:$0xf]
    %v763 = vld [vmem:[#allocation2 + $0x54] sm:$0xf]
    %v764 = vpack.c.bf16 %v747, %v747
    %v765 = vperm.slane %v68, 3
    %v782 = vunpack.c.l.b16 %v748
    %v783 = vunpack.c.l.b16 %v749
    %v784 = vunpack.c.l.b16 %v750
    %v785 = vunpack.c.l.b16 %v751
    %v786 = vunpack.c.l.b16 %v752
    %v787 = vunpack.c.l.b16 %v753
    %v788 = vunpack.c.l.b16 %v754
    %v789 = vunpack.c.l.b16 %v755
    %v790 = vunpack.c.l.b16 %v756
    %v791 = vunpack.c.l.b16 %v757
    %v792 = vunpack.c.l.b16 %v758
    %v793 = vunpack.c.l.b16 %v759
    %v794 = vunpack.c.l.b16 %v760
    %v795 = vunpack.c.l.b16 %v761
    %v796 = vunpack.c.l.b16 %v762
    %v797 = vunpack.c.l.b16 %v763
    %v798 = vpack.c.b16 %v783, %v782
    %v799 = vpack.c.b16 %v785, %v784
    %v800 = vpack.c.b16 %v787, %v786
    %v801 = vpack.c.b16 %v789, %v788
    %v802 = vpack.c.b16 %v791, %v790
    %v803 = vpack.c.b16 %v793, %v792
    %v804 = vpack.c.b16 %v795, %v794
    %v805 = vpack.c.b16 %v797, %v796
    %814 = vmatpush.bf16.msra.mxu0 %v805
    %815 = vmatpush.bf16.msra.mxu0 %v804
    %816 = vmatpush.bf16.msra.mxu0 %v803
    %817 = vmatpush.bf16.msra.mxu0 %v802
    %818 = vmatpush.bf16.msra.mxu0 %v801
    %819 = vmatpush.bf16.msra.mxu0 %v800
    %820 = vmatpush.bf16.msra.mxu0 %v799
    %821 = vmatpush.bf16.msra.mxu0 %v798
    %822 = vmatmul.bf16.gmra.mxu0 %v764
    %v823 = vpop.f32.mrf.mxu0
    %v824 = vadd.f32 %v765, %v823
    %v825 = vpop.f32.mrf.mxu0
    %826 = vdwg.mxu0
    %v827 = vtanh.pop %v824
    %v828 = vperm.slane %v68, 4
    %v829 = vmul.f32 %v827, %v828
    %830 = vadd.xlane.f32.xlu0 %v829
    %v831 = vpop.xlane.xlu0 %830
    %v832 = vperm.slane %v68, 5
    %v833 = vadd.f32 %v831, %v832
    %v834 = vxor.u32 %v833, 2147483648
    %v835 = vmul.f32 %v834, 1.442695
    %v836 = vpow.pop %v835
    %v837 = vadd.f32 %v836, 1.0
    %v838 = vrcp.pop %v837
    %v839 = vmul.f32 %v837, %v838
    %v840 = vsub.f32 1.0, %v839
    %v841 = vmul.f32 %v838, %v840
    %v842 = vadd.f32 %v838, %v841
    %vm843 = vweird.f32 %v837
    %vm844 = vweird.f32 %v838
    %vm845 = vmor %vm843, %vm844
    %v846 = vsel %vm845, %v838, %v842
    %v847 = vand.u32 2147483647, %v837
    %vm848 = vcmp.eq.f32.partialorder %v847, 8.507059e+37
    %v849 = vand.u32 %v837, 2147483648
    %v850 = vor.u32 1.1754944e-38, %v849
    %v851 = vsel %vm848, %v850, %v846
    %v852 = vmul.f32 1.0, %v851
    %853 = vst [vmem:[%s5] sm:$0xff] %v852
    // Predicated region
    $region34: #{model_scp_forward.1} parent=1 // pred_check
      _
    $region35: #{model_scp_forward.1} parent=1 // pred_check_branch
      %855 = sbr.rel (0) target = $region37
    $region36: #{model_scp_forward.1} parent=1 // pred_region
      _
    $region37: #{model_scp_forward.1} parent=1 // pred_fallthru
      _
    // Predicated region
    $region38: #{model_scp_forward.1} parent=1 // pred_check
      _
    $region39: #{model_scp_forward.1} parent=1 // pred_check_branch
      %857 = sbr.rel (0) target = $region41
    $region40: #{model_scp_forward.1} parent=1 // pred_region
      _
    $region41: #{model_scp_forward.1} parent=1 // pred_fallthru
      _
    %858 = vsyncpa [#allocation3], 1
    %859 = vsyncpa [#allocation5], 1

</llo_original>
